<compile_context>
chip_gen: v7x
topology: tpu7x:2x2x1
jax: 0.10.0
libtpu: 0.0.40
codegen_flags: <defaults>
</compile_context>

<pallas_src>
import math

import jax
import jax.numpy as jnp
from jax.experimental import pallas as pl
from jax.experimental.pallas import tpu as pltpu

_INV_SQRT2 = 1.0 / math.sqrt(2.0)
_TANH_COEF = math.sqrt(2.0 / math.pi)


def _gelu_exact(x):
    """nn.GELU() default: 0.5 * x * (1 + erf(x / sqrt(2)))."""
    return 0.5 * x * (1.0 + jax.lax.erf(x * _INV_SQRT2))


def _gelu_tanh(x):
    """nn.GELU(approximate='tanh'); the tanh runs on the EUP (separate slot)."""
    return 0.5 * x * (1.0 + jnp.tanh(_TANH_COEF * (x + 0.044715 * (x * x * x))))


def _make_mlp_kernel(gelu_dtype, use_tanh_gelu):
    gelu = _gelu_tanh if use_tanh_gelu else _gelu_exact

    def mlp_block_kernel(x_ref, w1_ref, b1_ref, w2_ref, b2_ref, o_ref):
        # Streamed (TM, H) row tile in the caller's dtype; cast to bf16 for the
        # MXU *inside* the kernel (no wrapper-side astype pass over x).
        x = x_ref[...]
        if x.dtype != jnp.bfloat16:
            x = x.astype(jnp.bfloat16)
        # linear1: MXU matmul with f32 accumulation; bias added in f32.
        h = jnp.dot(x, w1_ref[...], preferred_element_type=jnp.float32)
        h = h + b1_ref[...]
        # GELU epilogue. Default: exact erf in f32 (module-exact, v5e-safe).
        # On v6e/v7x set gelu_dtype=bf16 (2x packed VPU, half the (TM,F) temp)
        # or use_tanh_gelu=True (EUP tanh) if a bundle dump shows the VALU slot
        # co-critical with the MXU.
        h = gelu(h.astype(gelu_dtype))
        # linear2: MXU matmul + bias, cast to the requested output dtype.
        o = jnp.dot(h.astype(jnp.bfloat16), w2_ref[...],
                    preferred_element_type=jnp.float32)
        o = o + b2_ref[...]
        o_ref[...] = o.astype(o_ref.dtype)

    return mlp_block_kernel


def _round_up(v, m):
    return ((v + m - 1) // m) * m


def _vmem_capacity_bytes():
    """Per-core VMEM capacity; conservative 64 MiB (v7x) if the query fails."""
    try:
        return int(pltpu.get_tpu_info().vmem_capacity_bytes)
    except Exception:
        return 64 * 1024 * 1024


def _vmem_footprint(tm, h, f, x_bytes, out_bytes, gelu_bytes):
    """Conservative estimate of in-kernel VMEM usage for one grid step."""
    weights = 2 * h * f * 2                       # single-buffered bf16 w1 + w2
    biases = (f + h) * 4                          # resident f32 biases
    x_tiles = 2 * tm * h * x_bytes                # double-buffered input tiles
    o_tiles = 2 * tm * h * out_bytes              # double-buffered output tiles
    inter = tm * f * (2 * 4 + gelu_bytes + 2)     # f32 dot/bias temps + gelu + bf16 copy
    acc = tm * h * 4                              # f32 second-matmul result
    return weights + biases + x_tiles + o_tiles + inter + acc


def _choose_tm(m, tm_target, h, f, x_bytes, out_bytes, gelu_bytes, budget):
    # Large M: MXU-friendly target tile (multiple of 256 on v6e/v7x, 128 v5e).
    if m > tm_target:
        tm = tm_target
    else:
        # Small M: aim for >= 2 grid steps so the "parallel" M axis can shard
        # across both v7x TensorCores; tile must be a multiple of 8 (sublane)
        # or equal the full row extent.
        half = _round_up(pl.cdiv(m, 2), 8)
        tm = half if half < m else m
    # Shrink until the estimated footprint fits the per-chip VMEM budget.
    while tm > 8 and _vmem_footprint(tm, h, f, x_bytes, out_bytes, gelu_bytes) > budget:
        nxt = _round_up(tm // 2, 8)
        if nxt >= tm:
            break
        tm = nxt
    return tm


def mlp_block(x, w1, b1, w2, b2, *, tm_target=1024, out_dtype=None,
              gelu_dtype=jnp.float32, use_tanh_gelu=False,
              vmem_limit_bytes=None):
    """ViT MLPBlock forward: Linear2(GELU(Linear1(x))), dropout_rate = 0.

    x : (B, S, H) activations (f32 or bf16; cast to bf16 inside the kernel).
    w1: (H, F), b1: (F,), w2: (F, H), b2: (H,). Pass the weights in bf16
        persistently (cast once at init) so no per-call cast pass is needed.
    """
    B, S, H = x.shape
    F = w1.shape[1]
    M = B * S
    out_dtype = x.dtype if out_dtype is None else out_dtype

    capacity = _vmem_capacity_bytes()
    budget = (capacity * 7) // 8          # ~112 MiB on v5e/v6e, ~56 MiB on v7x
    if vmem_limit_bytes is None:
        vmem_limit_bytes = budget

    x_bytes = jnp.dtype(x.dtype).itemsize
    out_bytes = jnp.dtype(out_dtype).itemsize
    gelu_bytes = jnp.dtype(gelu_dtype).itemsize
    TM = _choose_tm(M, tm_target, H, F, x_bytes, out_bytes, gelu_bytes, budget)
    grid = (pl.cdiv(M, TM),)              # ragged tail handled by edge masking

    # Free (layout-preserving) reshape only; no dtype cast / pad of x here.
    x2d = x.reshape(M, H)
    # Weights should already be bf16 (persistent upstream); cast only if not.
    w1b = w1 if w1.dtype == jnp.bfloat16 else w1.astype(jnp.bfloat16)
    w2b = w2 if w2.dtype == jnp.bfloat16 else w2.astype(jnp.bfloat16)
    b1_2d = b1.reshape(1, F).astype(jnp.float32)
    b2_2d = b2.reshape(1, H).astype(jnp.float32)

    cost = pl.CostEstimate(
        flops=int(4 * M * H * F),          # two (M,H)x(H,F)-sized matmuls
        transcendentals=int(M * F),        # advisory; erf is a VALU polynomial
        bytes_accessed=int(M * H * (x_bytes + out_bytes)
                           + 2 * H * F * 2 + (F + H) * 4),
    )

    # Single resident VMEM copy (no double-buffering) for weights/biases:
    # their index would be constant across the grid anyway, and halving the
    # footprint is what keeps ViT-L/H resident inside v7x's 64 MiB VMEM.
    resident_vmem = pl.BlockSpec(memory_space=pltpu.MemorySpace.VMEM)

    out2d = pl.pallas_call(
        _make_mlp_kernel(gelu_dtype, use_tanh_gelu),
        out_shape=jax.ShapeDtypeStruct((M, H), out_dtype),
        grid=grid,
        in_specs=[
            pl.BlockSpec((TM, H), lambda i: (i, 0)),   # streamed x row tiles
            resident_vmem,                             # w1 (resident)
            resident_vmem,                             # b1 (resident)
            resident_vmem,                             # w2 (resident)
            resident_vmem,                             # b2 (resident)
        ],
        out_specs=pl.BlockSpec((TM, H), lambda i: (i, 0)),
        compiler_params=pltpu.CompilerParams(
            dimension_semantics=("parallel",),
            vmem_limit_bytes=int(vmem_limit_bytes),
        ),
        cost_estimate=cost,
    )(x2d, w1b, b1_2d, w2b, b2_2d)

    return out2d.reshape(B, S, H)


def _init_params(key, hidden_size, mlp_dim, dtype=jnp.float32):
    """Deterministic init mimicking nn.Linear (uniform +-1/sqrt(fan_in))."""
    k1, k2, k3, k4 = jax.random.split(key, 4)
    lim1 = 1.0 / math.sqrt(hidden_size)
    lim2 = 1.0 / math.sqrt(mlp_dim)
    w1 = jax.random.uniform(k1, (hidden_size, mlp_dim), dtype, -lim1, lim1)
    b1 = jax.random.uniform(k2, (mlp_dim,), dtype, -lim1, lim1)
    w2 = jax.random.uniform(k3, (mlp_dim, hidden_size), dtype, -lim2, lim2)
    b2 = jax.random.uniform(k4, (hidden_size,), dtype, -lim2, lim2)
    return w1, b1, w2, b2


def _ref_bf16_path(x2d, w1b, b1, w2b, b2):
    """Reference mirroring the kernel's bf16-rounded MXU path (f32 math)."""
    xb = x2d.astype(jnp.bfloat16).astype(jnp.float32)
    w1f = w1b.astype(jnp.float32)
    w2f = w2b.astype(jnp.float32)
    h = _gelu_exact(xb @ w1f + b1)
    h = h.astype(jnp.bfloat16).astype(jnp.float32)
    return h @ w2f + b2


if __name__ == "__main__":
    hidden_size = 32
    mlp_dim = 64
    batch, seq = 2, 8

    key = jax.random.PRNGKey(0)
    kx, kp = jax.random.split(key)
    x = jax.random.normal(kx, (batch, seq, hidden_size), jnp.float32)
    w1, b1, w2, b2 = _init_params(kp, hidden_size, mlp_dim)

    # Keep weights in bf16 persistently (done once at init, not per call).
    w1b, w2b = w1.astype(jnp.bfloat16), w2.astype(jnp.bfloat16)

    out = jax.block_until_ready(mlp_block(x, w1b, b1, w2b, b2))
    assert out.shape == (batch, seq, hidden_size)
    assert out.dtype == x.dtype

    # Tight check vs. a reference that mirrors the kernel's bf16-rounded path.
    ref_bf = _ref_bf16_path(x.reshape(-1, hidden_size), w1b, b1, w2b, b2)
    assert jnp.allclose(out.reshape(-1, hidden_size), ref_bf, atol=2e-3, rtol=2e-3)

    # Loose check against the pure-f32 module semantics.
    ref_f32 = _gelu_exact(x @ w1 + b1) @ w2 + b2
    assert jnp.allclose(out, ref_f32, atol=5e-2, rtol=5e-2)

    # Ragged row count (M not a multiple of the row tile) exercises the
    # no-pad / edge-masked tail path.
    x_r = jax.random.normal(jax.random.PRNGKey(1), (1, 11, hidden_size), jnp.float32)
    out_r = jax.block_until_ready(mlp_block(x_r, w1b, b1, w2b, b2))
    ref_r = _ref_bf16_path(x_r.reshape(-1, hidden_size), w1b, b1, w2b, b2)
    assert jnp.allclose(out_r.reshape(-1, hidden_size), ref_r, atol=2e-3, rtol=2e-3)

    print("KERNEL_OK")
</pallas_src>

<mosaic_0001>
module attributes {stable_mosaic.version = 11 : i64} {
  func.func @mlp_block_kernel(%arg0: i32, %arg1: memref<8x32xf32, #tpu.memory_space<vmem>>, %arg2: memref<32x64xbf16, #tpu.memory_space<vmem>>, %arg3: memref<1x64xf32, #tpu.memory_space<vmem>>, %arg4: memref<64x32xbf16, #tpu.memory_space<vmem>>, %arg5: memref<1x32xf32, #tpu.memory_space<vmem>>, %arg6: memref<8x32xf32, #tpu.memory_space<vmem>>) attributes {dimension_semantics = [#tpu.dimension_semantics<parallel>], iteration_bounds = array<i64: 2>, scalar_prefetch = 0 : i64, scratch_operands = 0 : i64, tpu.core_type = #tpu.core_type<tc>, window_params = [{transform_indices = @transform_0, window_bounds = array<i64: 8, 32>}, {pipeline_mode = #tpu.pipeline_mode<synchronous>, transform_indices = @transform_1, window_bounds = array<i64: 32, 64>}, {pipeline_mode = #tpu.pipeline_mode<synchronous>, transform_indices = @transform_2, window_bounds = array<i64: 1, 64>}, {pipeline_mode = #tpu.pipeline_mode<synchronous>, transform_indices = @transform_3, window_bounds = array<i64: 64, 32>}, {pipeline_mode = #tpu.pipeline_mode<synchronous>, transform_indices = @transform_4, window_bounds = array<i64: 1, 32>}, {transform_indices = @transform_5, window_bounds = array<i64: 8, 32>}]} {
    %c0 = arith.constant 0 : index
    %c0_0 = arith.constant 0 : index
    %0 = vector.load %arg1[%c0, %c0_0] : memref<8x32xf32, #tpu.memory_space<vmem>>, vector<8x32xf32>
    %1 = arith.truncf %0 : vector<8x32xf32> to vector<8x32xbf16>
    %c0_1 = arith.constant 0 : index
    %c0_2 = arith.constant 0 : index
    %2 = vector.load %arg2[%c0_1, %c0_2] : memref<32x64xbf16, #tpu.memory_space<vmem>>, vector<32x64xbf16>
    %cst = arith.constant dense<0.000000e+00> : vector<8x64xf32>
    %3 = tpu.matmul %1, %2, %cst {dimension_numbers = #tpu.dot_dimension_numbers<[1], [0], [0], [1], [0, 0, 1, 1], [], []>} : vector<8x32xbf16>, vector<32x64xbf16>, vector<8x64xf32> -> vector<8x64xf32>
    %c0_3 = arith.constant 0 : index
    %c0_4 = arith.constant 0 : index
    %4 = vector.load %arg3[%c0_3, %c0_4] : memref<1x64xf32, #tpu.memory_space<vmem>>, vector<1x64xf32>
    %5 = vector.broadcast %4 : vector<1x64xf32> to vector<8x64xf32>
    %6 = arith.addf %3, %5 : vector<8x64xf32>
    %cst_5 = arith.constant 5.000000e-01 : f32
    %7 = vector.broadcast %cst_5 : f32 to vector<8x64xf32>
    %8 = arith.mulf %7, %6 : vector<8x64xf32>
    %cst_6 = arith.constant 0.707106769 : f32
    %9 = vector.broadcast %cst_6 : f32 to vector<8x64xf32>
    %10 = arith.mulf %6, %9 : vector<8x64xf32>
    %11 = math.erf %10 : vector<8x64xf32>
    %cst_7 = arith.constant 1.000000e+00 : f32
    %12 = vector.broadcast %cst_7 : f32 to vector<8x64xf32>
    %13 = arith.addf %12, %11 : vector<8x64xf32>
    %14 = arith.mulf %8, %13 : vector<8x64xf32>
    %15 = arith.truncf %14 : vector<8x64xf32> to vector<8x64xbf16>
    %c0_8 = arith.constant 0 : index
    %c0_9 = arith.constant 0 : index
    %16 = vector.load %arg4[%c0_8, %c0_9] : memref<64x32xbf16, #tpu.memory_space<vmem>>, vector<64x32xbf16>
    %cst_10 = arith.constant dense<0.000000e+00> : vector<8x32xf32>
    %17 = tpu.matmul %15, %16, %cst_10 {dimension_numbers = #tpu.dot_dimension_numbers<[1], [0], [0], [1], [0, 0, 1, 1], [], []>} : vector<8x64xbf16>, vector<64x32xbf16>, vector<8x32xf32> -> vector<8x32xf32>
    %c0_11 = arith.constant 0 : index
    %c0_12 = arith.constant 0 : index
    %18 = vector.load %arg5[%c0_11, %c0_12] : memref<1x32xf32, #tpu.memory_space<vmem>>, vector<1x32xf32>
    %19 = vector.broadcast %18 : vector<1x32xf32> to vector<8x32xf32>
    %20 = arith.addf %17, %19 : vector<8x32xf32>
    %c0_13 = arith.constant 0 : index
    %c0_14 = arith.constant 0 : index
    %21 = vector.load %arg6[%c0_13, %c0_14] : memref<8x32xf32, #tpu.memory_space<vmem>>, vector<8x32xf32>
    tpu.vector_store %arg6[%c0_13, %c0_14], %20 {strides = array<i32>} : memref<8x32xf32, #tpu.memory_space<vmem>>, vector<8x32xf32>,
    return
  }
  func.func @transform_0(%arg0: i32) -> (i32, i32) {
    %c0_i32 = arith.constant 0 : i32
    %c0_i32_0 = arith.constant 0 : i32
    return %arg0, %c0_i32 : i32, i32
  }
  func.func @transform_1(%arg0: i32) -> (i32, i32) {
    %c0_i32 = arith.constant 0 : i32
    %c0_i32_0 = arith.constant 0 : i32
    %c0_i32_1 = arith.constant 0 : i32
    return %c0_i32, %c0_i32_0 : i32, i32
  }
  func.func @transform_2(%arg0: i32) -> (i32, i32) {
    %c0_i32 = arith.constant 0 : i32
    %c0_i32_0 = arith.constant 0 : i32
    %c0_i32_1 = arith.constant 0 : i32
    return %c0_i32, %c0_i32_0 : i32, i32
  }
  func.func @transform_3(%arg0: i32) -> (i32, i32) {
    %c0_i32 = arith.constant 0 : i32
    %c0_i32_0 = arith.constant 0 : i32
    %c0_i32_1 = arith.constant 0 : i32
    return %c0_i32, %c0_i32_0 : i32, i32
  }
  func.func @transform_4(%arg0: i32) -> (i32, i32) {
    %c0_i32 = arith.constant 0 : i32
    %c0_i32_0 = arith.constant 0 : i32
    %c0_i32_1 = arith.constant 0 : i32
    return %c0_i32, %c0_i32_0 : i32, i32
  }
  func.func @transform_5(%arg0: i32) -> (i32, i32) {
    %c0_i32 = arith.constant 0 : i32
    %c0_i32_0 = arith.constant 0 : i32
    return %arg0, %c0_i32 : i32, i32
  }
}

</mosaic_0001>

<llo_original>
// kernel: tpu_custom_call.1
$region0: #{tpu_custom_call.1}
  #allocation0 [shape = 'u32[]', space=smem, size = 0x4, offset = 0x4, fixed_abs, tag = 'smem constant byte address 0x4 - core index']
  #allocation1 [shape = 'u32[144,128]{1,0:T(1,128)}', space=vmem, size = 0x12000, scoped, tag = 'internal scratch']
  %s0 = inlined_call_operand.vmem [shape: f32[16,32], index: 0, kind: input, shape index: {}]
  %s1 = inlined_call_operand.vmem [shape: bf16[32,64], index: 1, kind: input, shape index: {}]
  %s2 = inlined_call_operand.vmem [shape: f32[1,64], index: 2, kind: input, shape index: {}]
  %s3 = inlined_call_operand.vmem [shape: bf16[64,32], index: 3, kind: input, shape index: {}]
  %s4 = inlined_call_operand.vmem [shape: f32[1,32], index: 4, kind: input, shape index: {}]
  %s5 = inlined_call_operand.hbm [shape: f32[16,32], index: 5, kind: output, shape index: {}]
  %s6 = sld [smem:[#allocation0]]
  $region53: #{tpu_custom_call.1} parent=0
    _
  %s8 = ssub.s32 1, %s6
  %s9 = scalar_select 0, %s8, %s6
  $region1: #{tpu_custom_call.1} parent=0
    #allocation2 [shape = 'u8[8192]{0}', space=vmem, size = 0x2000, scoped, tag = 'output window, operand 0']
    #allocation3 [shape = 's32[2]{0}', space=sflag, size = 0x8, scoped, tag = 'scoped memory for tpu_custom_call.1']
    %10 = vsyncpa [#allocation3], 0
    %s11 = scalar_lea.sflag [#allocation3], 1
    %12 = vsyncpa %s11, 0
    loop: start=0, step=1, limit=4
    $region2: #{tpu_custom_call.1} parent=1 // loop_pre_header
      _
    $region3: #{tpu_custom_call.1} parent=1 // loop_header
      %s14 = sphi 0, %s18
      %p15 = scmp.ge.s32.totalorder %s14, 4
      %s24 = sphi 0, %s26
      %s27 = sphi 0, %s24
      %s28 = sphi 0, %s27
      %s44 = sphi 0, %s28
      %s48 = sphi 0, %s48
      %s50 = sphi 0, %s48
      %s51 = sphi 0, %s50
      %s65 = sphi 0, %s51
      %s69 = sphi 0, %s69
      %s71 = sphi 0, %s69
      %s72 = sphi 0, %s71
      %s86 = sphi 0, %s72
      %s90 = sphi 0, %s90
      %s92 = sphi 0, %s90
      %s93 = sphi 0, %s92
      %s107 = sphi 0, %s93
      %s111 = sphi 0, %s111
      %s113 = sphi 0, %s111
      %s114 = sphi 0, %s113
      %s128 = sphi 0, %s114
      %s134 = sphi 0, %s136
      %s137 = sphi 0, %s134
      %s138 = sphi 0, %s137
      %s154 = sphi 0, %s138
    $region4: #{tpu_custom_call.1} parent=1 // loop_header_branch
      %17 = sbr.rel (%p15) target = $region8
    $region5: #{tpu_custom_call.1} parent=1 // loop_body
      %s19 = ssub.s32 %s14, 1
      %s20 = ssub.s32 %s14, 2
      %s21 = sadd.s32 %s14, 1
      %s22 = ssub.s32 %s14, %s21
      %p23 = scmp.eq.s32.totalorder %s22, 0
      %s25 = sadd.s32 %s24, 1
      %s26 = scalar_select %p23, %s24, %s25
      %p29 = pneg %p23
      %p30 = scmp.eq.s32.totalorder %s14, 1
      %p31 = por %p29, %p30
      %p32 = scmp.ne.s32.totalorder %s24, %s27
      %p33 = scmp.eq.s32.totalorder %s14, 0
      %p34 = por %p32, %p33
      %p35 = scmp.ne.s32.totalorder %s24, %s27
      %p36 = scmp.eq.s32.totalorder %s19, 1
      %p37 = por %p35, %p36
      %p38 = scmp.ne.s32.totalorder %s27, %s28
      %p39 = scmp.eq.s32.totalorder %s19, 0
      %p40 = por %p38, %p39
      %p41 = scmp.ne.s32.totalorder %s27, %s28
      %p42 = scmp.eq.s32.totalorder %s20, 1
      %p43 = por %p41, %p42
      %p45 = scmp.ne.s32.totalorder %s28, %s44
      %p46 = scmp.eq.s32.totalorder %s20, 0
      %p47 = por %p45, %p46
      %s49 = sadd.s32 %s48, 1
      %p52 = scmp.eq.s32.totalorder %s14, 1
      %p53 = scmp.ne.s32.totalorder %s48, %s50
      %p54 = scmp.eq.s32.totalorder %s14, 0
      %p55 = por %p53, %p54
      %p56 = scmp.ne.s32.totalorder %s48, %s50
      %p57 = scmp.eq.s32.totalorder %s19, 1
      %p58 = por %p56, %p57
      %p59 = scmp.ne.s32.totalorder %s50, %s51
      %p60 = scmp.eq.s32.totalorder %s19, 0
      %p61 = por %p59, %p60
      %p62 = scmp.ne.s32.totalorder %s50, %s51
      %p63 = scmp.eq.s32.totalorder %s20, 1
      %p64 = por %p62, %p63
      %p66 = scmp.ne.s32.totalorder %s51, %s65
      %p67 = scmp.eq.s32.totalorder %s20, 0
      %p68 = por %p66, %p67
      %s70 = sadd.s32 %s69, 1
      %p73 = scmp.eq.s32.totalorder %s14, 1
      %p74 = scmp.ne.s32.totalorder %s69, %s71
      %p75 = scmp.eq.s32.totalorder %s14, 0
      %p76 = por %p74, %p75
      %p77 = scmp.ne.s32.totalorder %s69, %s71
      %p78 = scmp.eq.s32.totalorder %s19, 1
      %p79 = por %p77, %p78
      %p80 = scmp.ne.s32.totalorder %s71, %s72
      %p81 = scmp.eq.s32.totalorder %s19, 0
      %p82 = por %p80, %p81
      %p83 = scmp.ne.s32.totalorder %s71, %s72
      %p84 = scmp.eq.s32.totalorder %s20, 1
      %p85 = por %p83, %p84
      %p87 = scmp.ne.s32.totalorder %s72, %s86
      %p88 = scmp.eq.s32.totalorder %s20, 0
      %p89 = por %p87, %p88
      %s91 = sadd.s32 %s90, 1
      %p94 = scmp.eq.s32.totalorder %s14, 1
      %p95 = scmp.ne.s32.totalorder %s90, %s92
      %p96 = scmp.eq.s32.totalorder %s14, 0
      %p97 = por %p95, %p96
      %p98 = scmp.ne.s32.totalorder %s90, %s92
      %p99 = scmp.eq.s32.totalorder %s19, 1
      %p100 = por %p98, %p99
      %p101 = scmp.ne.s32.totalorder %s92, %s93
      %p102 = scmp.eq.s32.totalorder %s19, 0
      %p103 = por %p101, %p102
      %p104 = scmp.ne.s32.totalorder %s92, %s93
      %p105 = scmp.eq.s32.totalorder %s20, 1
      %p106 = por %p104, %p105
      %p108 = scmp.ne.s32.totalorder %s93, %s107
      %p109 = scmp.eq.s32.totalorder %s20, 0
      %p110 = por %p108, %p109
      %s112 = sadd.s32 %s111, 1
      %p115 = scmp.eq.s32.totalorder %s14, 1
      %p116 = scmp.ne.s32.totalorder %s111, %s113
      %p117 = scmp.eq.s32.totalorder %s14, 0
      %p118 = por %p116, %p117
      %p119 = scmp.ne.s32.totalorder %s111, %s113
      %p120 = scmp.eq.s32.totalorder %s19, 1
      %p121 = por %p119, %p120
      %p122 = scmp.ne.s32.totalorder %s113, %s114
      %p123 = scmp.eq.s32.totalorder %s19, 0
      %p124 = por %p122, %p123
      %p125 = scmp.ne.s32.totalorder %s113, %s114
      %p126 = scmp.eq.s32.totalorder %s20, 1
      %p127 = por %p125, %p126
      %p129 = scmp.ne.s32.totalorder %s114, %s128
      %p130 = scmp.eq.s32.totalorder %s20, 0
      %p131 = por %p129, %p130
      %s132 = ssub.s32 %s14, %s21
      %p133 = scmp.eq.s32.totalorder %s132, 0
      %s135 = sadd.s32 %s134, 1
      %s136 = scalar_select %p133, %s134, %s135
      %p139 = pneg %p133
      %p140 = scmp.eq.s32.totalorder %s14, 1
      %p141 = por %p139, %p140
      %p142 = scmp.ne.s32.totalorder %s134, %s137
      %p143 = scmp.eq.s32.totalorder %s14, 0
      %p144 = por %p142, %p143
      %p145 = scmp.ne.s32.totalorder %s134, %s137
      %p146 = scmp.eq.s32.totalorder %s19, 1
      %p147 = por %p145, %p146
      %p148 = scmp.ne.s32.totalorder %s137, %s138
      %p149 = scmp.eq.s32.totalorder %s19, 0
      %p150 = por %p148, %p149
      %p151 = scmp.ne.s32.totalorder %s137, %s138
      %p152 = scmp.eq.s32.totalorder %s20, 1
      %p153 = por %p151, %p152
      %p155 = scmp.ne.s32.totalorder %s138, %s154
      %p156 = scmp.eq.s32.totalorder %s20, 0
      %p157 = por %p155, %p156
      %p158 = scmp.le.s32.totalorder 1, %s14
      %p159 = scmp.lt.s32.totalorder %s14, 3
      %p160 = pnand %p158, %p159
      %p161 = pneg %p160
      // Predicated region
      $region9: #{tpu_custom_call.1} parent=5 // pred_check
        _
      $region10: #{tpu_custom_call.1} parent=5 // pred_check_branch
        %163 = sbr.rel (%p160) target = $region12
      $region11: #{tpu_custom_call.1} parent=5 // pred_region
        %s164 = ssub.s32 %s14, 1
        // Predicated region
        $region13: #{tpu_custom_call.1} parent=11 // pred_check
          %p165 = pneg %p61
        $region14: #{tpu_custom_call.1} parent=11 // pred_check_branch
          %167 = sbr.rel (%p165) target = $region16
        $region15: #{tpu_custom_call.1} parent=11 // pred_region
          _
        $region16: #{tpu_custom_call.1} parent=11 // pred_fallthru
          _
        // Predicated region
        $region17: #{tpu_custom_call.1} parent=11 // pred_check
          %p168 = pneg %p82
        $region18: #{tpu_custom_call.1} parent=11 // pred_check_branch
          %170 = sbr.rel (%p168) target = $region20
        $region19: #{tpu_custom_call.1} parent=11 // pred_region
          _
        $region20: #{tpu_custom_call.1} parent=11 // pred_fallthru
          _
        // Predicated region
        $region21: #{tpu_custom_call.1} parent=11 // pred_check
          %p171 = pneg %p103
        $region22: #{tpu_custom_call.1} parent=11 // pred_check_branch
          %173 = sbr.rel (%p171) target = $region24
        $region23: #{tpu_custom_call.1} parent=11 // pred_region
          _
        $region24: #{tpu_custom_call.1} parent=11 // pred_fallthru
          _
        // Predicated region
        $region25: #{tpu_custom_call.1} parent=11 // pred_check
          %p174 = pneg %p124
        $region26: #{tpu_custom_call.1} parent=11 // pred_check_branch
          %176 = sbr.rel (%p174) target = $region28
        $region27: #{tpu_custom_call.1} parent=11 // pred_region
          _
        $region28: #{tpu_custom_call.1} parent=11 // pred_fallthru
          _
      $region12: #{tpu_custom_call.1} parent=5 // pred_fallthru
        _
      %p177 = scmp.lt.s32.totalorder %s14, 2
      // Predicated region
      $region29: #{tpu_custom_call.1} parent=5 // pred_check
        %p178 = pneg %p177
      $region30: #{tpu_custom_call.1} parent=5 // pred_check_branch
        %180 = sbr.rel (%p178) target = $region32
      $region31: #{tpu_custom_call.1} parent=5 // pred_region
        // Predicated region
        $region33: #{tpu_custom_call.1} parent=31 // pred_check
          %p181 = pneg %p34
        $region34: #{tpu_custom_call.1} parent=31 // pred_check_branch
          %183 = sbr.rel (%p181) target = $region36
        $region35: #{tpu_custom_call.1} parent=31 // pred_region
          %p184 = scmp.lt.s32.totalorder %s14, 1
          %s185 = scalar_select %p184, %s14, 1
          %s186 = smul.addr %s185, 8
          %s187 = scalar_lea.vmem %s0, %s186
        $region36: #{tpu_custom_call.1} parent=31 // pred_fallthru
          _
      $region32: #{tpu_custom_call.1} parent=5 // pred_fallthru
        _
      %p188 = scmp.le.s32.totalorder 1, %s14
      %p189 = scmp.lt.s32.totalorder %s14, 3
      %p190 = pnand %p188, %p189
      %p191 = pneg %p190
      // Predicated region
      $region37: #{tpu_custom_call.1} parent=5 // pred_check
        _
      $region38: #{tpu_custom_call.1} parent=5 // pred_check_branch
        %193 = sbr.rel (%p190) target = $region40
      $region39: #{tpu_custom_call.1} parent=5 // pred_region
        %s194 = ssub.s32 %s14, 1
        %p195 = scmp.lt.s32.totalorder %s19, 1
        %s196 = scalar_select %p195, %s19, 1
        %s197 = smul.addr %s196, 8
        %s198 = scalar_lea.vmem %s0, %s197
        %p199 = pneg %p40
        %p200 = pneg %p37
        %p201 = pneg %p61
        %p202 = pneg %p58
        %p203 = pneg %p82
        %p204 = pneg %p79
        %p205 = pneg %p103
        %p206 = pneg %p100
        %p207 = pneg %p124
        %p208 = pneg %p121
        %p209 = pneg %p150
        %p210 = pneg %p147
        %s211 = sand.u32 %s137, 1
        %s212 = scalar_lea.sflag [#allocation3], %s211
        %s213 = sand.u32 %s137, 1
        %s214 = smul.addr %s213, 8
        %s215 = scalar_lea.vmem [#allocation2], %s214
        %p216 = scmp.lt.s32.totalorder %s19, 1
        %s217 = scalar_select %p216, %s19, 1
        %s218 = smul.addr %s217, 8
        %s219 = scalar_lea.vmem %s0, %s218
        %v221 = vld [vmem:[%s219] sm:$0xff]
        %v222 = vpack.c.bf16 %v221, %v221
        %v223 = vld [vmem:[%s1] sm:$0xf]
        %v224 = vld [vmem:[%s1 + $0x4] sm:$0xf]
        %v225 = vld [vmem:[%s1 + $0x8] sm:$0xf]
        %v226 = vld [vmem:[%s1 + $0xc] sm:$0xf]
        %v227 = vld [vmem:[%s2] sm:$0x1]
        %v229 = vlaneseq
        %v230 = vshrl.u32 %v229, 7
        %v231 = vsub.s32 0, %v230
        %v232 = vrot.slane %v227, %v231
        %v238 = vunpack.c.l.b16 %v223
        %v239 = vunpack.c.l.b16 %v224
        %v240 = vunpack.c.l.b16 %v225
        %v241 = vunpack.c.l.b16 %v226
        %v242 = vpack.c.b16 %v239, %v238
        %v243 = vpack.c.b16 %v241, %v240
        %vm246 = vcmask 261120
        %v248 = vsel %vm246, %v222, 0
        %250 = vmatprep.subr.bf16.mxu0 0
        %251 = vmatpush1.bf16.msra.mxu0 %v242
        %252 = vmatprep.subr.bf16.mxu0 0
        %253 = vmatpush1.bf16.msra.mxu0 %v243
        %254 = vmatprep.subr.bf16.mxu0 0
        %255 = vmatpush1.bf16.msra.mxu0 0
        %256 = vmatprep.subr.bf16.mxu0 0
        %257 = vmatpush1.bf16.msra.mxu0 0
        %258 = vmatprep.subr.bf16.mxu0 0
        %259 = vmatpush1.bf16.msra.mxu0 0
        %260 = vmatprep.subr.bf16.mxu0 0
        %261 = vmatpush1.bf16.msra.mxu0 0
        %262 = vmatprep.subr.bf16.mxu0 0
        %263 = vmatpush1.bf16.msra.mxu0 0
        %264 = vmatprep.subr.bf16.mxu0 0
        %265 = vmatpush1.bf16.msra.mxu0 0
        %266 = vmatprep.subr.bf16.mxu0 0
        %267 = vmatpush1.bf16.msra.mxu0 0
        %268 = vmatprep.subr.bf16.mxu0 0
        %269 = vmatpush1.bf16.msra.mxu0 0
        %270 = vmatprep.subr.bf16.mxu0 0
        %271 = vmatpush1.bf16.msra.mxu0 0
        %272 = vmatprep.subr.bf16.mxu0 0
        %273 = vmatpush1.bf16.msra.mxu0 0
        %274 = vmatprep.subr.bf16.mxu0 0
        %275 = vmatpush1.bf16.msra.mxu0 0
        %276 = vmatprep.subr.bf16.mxu0 0
        %277 = vmatpush1.bf16.msra.mxu0 0
        %278 = vmatprep.subr.bf16.mxu0 0
        %279 = vmatpush1.bf16.msra.mxu0 0
        %280 = vmatprep.subr.bf16.mxu0 0
        %281 = vmatpush1.bf16.msra.mxu0 0
        %282 = vmatprep.mubr.bf16.mxu0 0
        %283 = vmatmul.mubr.bf16.gmra.mrb[0].mxu0 %v248
        %v284 = vpop.f32.mrb[0].mxu0
        %v285 = vadd.f32 %v232, %v284
        %v286 = vpop.f32.mrb[0].mxu0
        %v287 = vpop.f32.mrb[0].mxu0
        %v288 = vpop.f32.mrb[0].mxu0
        %289 = vdwg.mxu0
        %v290 = vmul.f32 %v285, 0.5
        %v291 = vmul.f32 %v285, 0.70710677
        %v292 = verf.f32.pop %v291
        %v293 = vadd.f32 %v292, 1.0
        %v294 = vmul.f32 %v290, %v293
        %v295 = vpack.c.bf16 %v294, %v294
        %v296 = vld [vmem:[%s3] sm:$0xf]
        %v297 = vld [vmem:[%s3 + $0x4] sm:$0xf]
        %v298 = vld [vmem:[%s3 + $0x8] sm:$0xf]
        %v299 = vld [vmem:[%s3 + $0xc] sm:$0xf]
        %v300 = vld [vmem:[%s3 + $0x10] sm:$0xf]
        %v301 = vld [vmem:[%s3 + $0x14] sm:$0xf]
        %v302 = vld [vmem:[%s3 + $0x18] sm:$0xf]
        %v303 = vld [vmem:[%s3 + $0x1c] sm:$0xf]
        %v304 = vld [vmem:[%s4] sm:$0x1]
        %v306 = vlaneseq
        %v307 = vshrl.u32 %v306, 7
        %v308 = vsub.s32 0, %v307
        %v309 = vrot.slane %v304, %v308
        %v319 = vunpack.c.l.b16 %v296
        %v320 = vunpack.c.l.b16 %v297
        %v321 = vunpack.c.l.b16 %v298
        %v322 = vunpack.c.l.b16 %v299
        %v323 = vunpack.c.l.b16 %v300
        %v324 = vunpack.c.l.b16 %v301
        %v325 = vunpack.c.l.b16 %v302
        %v326 = vunpack.c.l.b16 %v303
        %v327 = vpack.c.b16 %v320, %v319
        %v328 = vpack.c.b16 %v322, %v321
        %v329 = vpack.c.b16 %v324, %v323
        %v330 = vpack.c.b16 %v326, %v325
        %vm335 = vcmask 523264
        %v337 = vsel %vm335, %v295, 0
        %339 = vmatprep.subr.bf16.mxu0 0
        %340 = vmatpush1.bf16.msra.mxu0 %v327
        %341 = vmatprep.subr.bf16.mxu0 0
        %342 = vmatpush1.bf16.msra.mxu0 %v328
        %343 = vmatprep.subr.bf16.mxu0 0
        %344 = vmatpush1.bf16.msra.mxu0 %v329
        %345 = vmatprep.subr.bf16.mxu0 0
        %346 = vmatpush1.bf16.msra.mxu0 %v330
        %347 = vmatprep.subr.bf16.mxu0 0
        %348 = vmatpush1.bf16.msra.mxu0 0
        %349 = vmatprep.subr.bf16.mxu0 0
        %350 = vmatpush1.bf16.msra.mxu0 0
        %351 = vmatprep.subr.bf16.mxu0 0
        %352 = vmatpush1.bf16.msra.mxu0 0
        %353 = vmatprep.subr.bf16.mxu0 0
        %354 = vmatpush1.bf16.msra.mxu0 0
        %355 = vmatprep.subr.bf16.mxu0 0
        %356 = vmatpush1.bf16.msra.mxu0 0
        %357 = vmatprep.subr.bf16.mxu0 0
        %358 = vmatpush1.bf16.msra.mxu0 0
        %359 = vmatprep.subr.bf16.mxu0 0
        %360 = vmatpush1.bf16.msra.mxu0 0
        %361 = vmatprep.subr.bf16.mxu0 0
        %362 = vmatpush1.bf16.msra.mxu0 0
        %363 = vmatprep.subr.bf16.mxu0 0
        %364 = vmatpush1.bf16.msra.mxu0 0
        %365 = vmatprep.subr.bf16.mxu0 0
        %366 = vmatpush1.bf16.msra.mxu0 0
        %367 = vmatprep.subr.bf16.mxu0 0
        %368 = vmatpush1.bf16.msra.mxu0 0
        %369 = vmatprep.subr.bf16.mxu0 0
        %370 = vmatpush1.bf16.msra.mxu0 0
        %371 = vmatprep.mubr.bf16.mxu0 0
        %372 = vmatmul.mubr.bf16.gmra.mrb[0].mxu0 %v337
        %v373 = vpop.f32.mrb[0].mxu0
        %v374 = vadd.f32 %v309, %v373
        %v375 = vpop.f32.mrb[0].mxu0
        %v376 = vpop.f32.mrb[0].mxu0
        %v377 = vpop.f32.mrb[0].mxu0
        %378 = vdwg.mxu0
        %379 = vst.msk [vmem:[%s215] sm:$0xff] %vm246, %v374
        %s380 = sand.u32 %s137, 1
        %s381 = scalar_lea.sflag [#allocation3], %s380
        %s382 = sand.u32 %s137, 1
        %s383 = smul.addr %s382, 8
        %s384 = scalar_lea.vmem [#allocation2], %s383
        // Predicated region
        $region41: #{tpu_custom_call.1} parent=39 // pred_check
          %p385 = pneg %p147
        $region42: #{tpu_custom_call.1} parent=39 // pred_check_branch
          %387 = sbr.rel (%p385) target = $region44
        $region43: #{tpu_custom_call.1} parent=39 // pred_region
          %s389 = ssub.s32 128, 128
          %390 = vsyncadd %s381, %s389
          %s391 = smul.addr %s19, 128
          %s392 = scalar_lea.hbm %s5, %s391
          %s394 = sshll.u32 %s384, 4
          %s395 = int_to_ptr.vmem [resolvable:$true] %s394
          %397 = dma.vmem_to_hbm [thread:$0]  %s395, 128, %s392, %s381
        $region44: #{tpu_custom_call.1} parent=39 // pred_fallthru
          _
      $region40: #{tpu_custom_call.1} parent=5 // pred_fallthru
        _
      %p398 = scmp.le.s32.totalorder 2, %s14
      // Predicated region
      $region45: #{tpu_custom_call.1} parent=5 // pred_check
        %p399 = pneg %p398
      $region46: #{tpu_custom_call.1} parent=5 // pred_check_branch
        %401 = sbr.rel (%p399) target = $region48
      $region47: #{tpu_custom_call.1} parent=5 // pred_region
        %s402 = ssub.s32 %s14, 2
        // Predicated region
        $region49: #{tpu_custom_call.1} parent=47 // pred_check
          %p403 = pneg %p153
        $region50: #{tpu_custom_call.1} parent=47 // pred_check_branch
          %405 = sbr.rel (%p403) target = $region52
        $region51: #{tpu_custom_call.1} parent=47 // pred_region
          %s406 = sand.u32 %s138, 1
          %s407 = scalar_lea.sflag [#allocation3], %s406
          %s408 = sand.u32 %s138, 1
          %s409 = smul.addr %s408, 8
          %s410 = scalar_lea.vmem [#allocation2], %s409
          %411 = dma.done %s407, 128
        $region52: #{tpu_custom_call.1} parent=47 // pred_fallthru
          _
      $region48: #{tpu_custom_call.1} parent=5 // pred_fallthru
        _
    $region6: #{tpu_custom_call.1} parent=1 // loop_footer
      %s18 = sadd.s32 1, %s14
    $region7: #{tpu_custom_call.1} parent=1 // loop_footer_branch
      %13 = sbr.rel target = $region3
    $region8: #{tpu_custom_call.1} parent=1 // loop_exit
      _
    %412 = vsyncpa [#allocation3], 1
    %s413 = scalar_lea.sflag [#allocation3], 1
    %414 = vsyncpa %s413, 1

</llo_original>
